<compile_context>
chip_gen: v7x
topology: tpu7x:2x2x1
jax: 0.10.0
libtpu: 0.0.40
codegen_flags: <defaults>
</compile_context>

<pallas_src>
import functools

import jax
import jax.numpy as jnp
from jax import lax
from jax.experimental import pallas as pl
from jax.experimental.pallas import tpu as pltpu


# ----------------------------------------------------------------------------
# Pallas kernel: fused soft-shift attention
# grid = (batch, q_tile); per-step refs are 2-D (leading size-1 dim squeezed)
# ----------------------------------------------------------------------------
def _soft_shift_attention_kernel(q_ref, vt_ref, v_ref, sc_ref, out_ref):
    # q_ref  : (tq, Kp)  f32  im2col(former) rows for this q tile (K zero-padded)
    # vt_ref : (Kp, hw)  f32  pre-transposed latter patches (MXU-natural Q@V^T)
    # v_ref  : (hw, Kp)  bf16 latter patches for the P@V matmul
    # sc_ref : (2,  hw)  f32  row0: scale = 10*mm/max(||V||,1e-4) ; row1: mm
    # out_ref: (tq, Kp)  f32  (P@V)/9
    scale = sc_ref[0:1, :]                       # (1, hw)
    mm = sc_ref[1:2, :]                          # (1, hw)

    # Scores Q @ V^T on the MXU, f32 accumulation.  Kept f32: the x10-scaled
    # cosine softmax is too sensitive for bf16 scores at the test tolerance.
    s = jnp.dot(q_ref[...], vt_ref[...], preferred_element_type=jnp.float32)

    # logits = (s / den) * mm * 10, fused into a single multiply
    logits = s * scale

    # softmax over the patch axis, then re-mask (matches PyTorch order exactly;
    # masked patches keep logit 0 inside the softmax, as in the original code)
    m = jnp.max(logits, axis=-1, keepdims=True)
    e = jnp.exp(logits - m)
    inv = pl.reciprocal(jnp.sum(e, axis=-1, keepdims=True), approx=True)
    probs = e * inv * mm

    # Weighted patch sum: bf16 MXU inputs, f32 accumulation; /9 folded here.
    out = jnp.dot(probs.astype(v_ref.dtype), v_ref[...],
                  preferred_element_type=jnp.float32)
    out_ref[...] = out * (1.0 / 9.0)


# ----------------------------------------------------------------------------
# Glue helpers
# ----------------------------------------------------------------------------
def _unfold(x, k, pad):
    """torch-style x_pad.unfold(2,k,1).unfold(3,k,1).

    x: (B, C, h, w) -> (B, C, h, w, k, k); win[..., r, s, i, j] = xpad[..., r+i, s+j]
    """
    B, C, h, w = x.shape
    xp = jnp.pad(x, ((0, 0), (0, 0), (pad, pad), (pad, pad)))
    cols = [xp[:, :, i:i + h, j:j + w] for i in range(k) for j in range(k)]
    return jnp.stack(cols, axis=-1).reshape(B, C, h, w, k, k)


def _col2im_weight(c2, k):
    """HWIO grouped-conv weight implementing the 3x3 overlap-add scatter."""
    w = jnp.zeros((k, k, k * k, 1), jnp.float32)
    for ki in range(k):
        for kj in range(k):
            w = w.at[k - 1 - ki, k - 1 - kj, ki * k + kj, 0].set(1.0)
    return jnp.tile(w, (1, 1, 1, c2))            # (k, k, k*k, c2)


def _col2im_conv(t, h, w, c2, k, pad):
    """Single-pass overlap-add (== F.conv_transpose2d scatter) via grouped conv.

    t: (B, hw, c2*k*k) with feature order (c, ki, kj) -> (B, c2, h, w)
    """
    B = t.shape[0]
    lhs = t.reshape(B, h, w, c2 * k * k)          # NHWC, channel groups = c
    rhs = _col2im_weight(c2, k)
    P = k - 1 - pad
    out = lax.conv_general_dilated(
        lhs, rhs, (1, 1), [(P, P), (P, P)],
        dimension_numbers=('NHWC', 'HWIO', 'NHWC'),
        feature_group_count=c2,
        precision=lax.Precision.HIGHEST)          # (B, h, w, c2)
    return out.transpose(0, 3, 1, 2)


def _shift_prepare(feat, mask, shift_sz, mask_thred):
    """Shared patch / mask statistics for both the Pallas and reference paths."""
    B, C, h, w = feat.shape
    C2 = C // 2
    k = shift_sz
    pad = k // 2
    latter = feat[:, C2:]
    # latter_all_windows.contiguous().view(bz, -1, c//2, k, k): row-major reshape
    latter_win = _unfold(latter, k, pad).reshape(B, h * w, C2, k, k)
    den = jnp.sqrt(jnp.sum(latter_win * latter_win, axis=(2, 3, 4)))
    den = jnp.maximum(den, 1e-4)                                    # (B, hw)
    # mm = (mean of mask over each window) <= mask_thred / k^2 (two-step mean)
    m_win = _unfold(mask, k, pad).reshape(B, 1, h * w, k, k)
    m_mean = jnp.mean(jnp.mean(m_win, axis=3), axis=3)
    mm = (m_mean <= mask_thred / float(k * k)).astype(jnp.float32).reshape(B, h * w)
    return latter_win, den, mm


def _pick_q_tile(hw):
    if hw <= 256:
        return hw
    for cand in (256, 128, 64, 32, 16, 8):
        if hw % cand == 0:
            return cand
    return hw


# ----------------------------------------------------------------------------
# Soft shift: Pallas path
# ----------------------------------------------------------------------------
def _soft_shift_pallas(feat, latter_win, den, mm, shift_sz):
    B, C, h, w = feat.shape
    C2 = C // 2
    hw = h * w
    k = shift_sz
    pad = k // 2
    K = C2 * k * k
    Kp = ((K + 127) // 128) * 128          # lane-dense operands / output

    former = feat[:, :C2]
    latter = feat[:, C2:]

    # Q: im2col of former, feature ordering (c, ki, kj) -> (B, hw, K)
    q = _unfold(former, k, pad).transpose(0, 2, 3, 1, 4, 5).reshape(B, hw, K)
    v = latter_win.reshape(B, hw, K)

    q = jnp.pad(q, ((0, 0), (0, 0), (0, Kp - K)))
    v = jnp.pad(v, ((0, 0), (0, 0), (0, Kp - K)))
    vt = jnp.swapaxes(v, 1, 2)                    # (B, Kp, hw) f32 for Q@V^T
    v_bf16 = v.astype(jnp.bfloat16)               # bf16 stream for P@V

    # scale = 10 * mm / max(||V||, 1e-4); merged with mm into one input stream
    scale = (10.0 * mm / den).astype(jnp.float32)
    sc = jnp.stack([scale, mm], axis=1)           # (B, 2, hw)

    tq = _pick_q_tile(hw)
    nq = hw // tq
    # NOTE: at toy sizes (hw=64, B=2) the kernel is fixed-overhead bound; the
    # tiling/VMEM sizing below targets realistic Shift-Net shapes (hw>=1024).
    vmem_est = (4 * 2 * tq * Kp        # q tiles, double-buffered f32
                + 4 * 2 * tq * Kp      # out tiles, double-buffered f32
                + 4 * 2 * Kp * hw      # V^T, f32
                + 2 * 2 * hw * Kp      # V, bf16
                + 4 * 2 * 8 * hw       # scale/mm (sublane-padded)
                + 4 * 4 * tq * hw)     # s / e / probs intermediates
    vmem_limit = int(min(64 << 20, max(32 << 20, 2 * vmem_est)))

    cost = pl.CostEstimate(
        flops=int(4 * B * hw * hw * Kp),
        transcendentals=int(B * hw * hw),
        bytes_accessed=int(4 * B * hw * Kp      # q
                           + 4 * B * Kp * hw    # vt
                           + 2 * B * hw * Kp    # v bf16
                           + 4 * B * hw * Kp    # out
                           + 4 * B * 2 * hw),
    )

    t = pl.pallas_call(
        _soft_shift_attention_kernel,
        out_shape=jax.ShapeDtypeStruct((B, hw, Kp), jnp.float32),
        grid_spec=pltpu.PrefetchScalarGridSpec(
            num_scalar_prefetch=0,
            grid=(B, nq),
            in_specs=[
                pl.BlockSpec((None, tq, Kp), lambda b, qi: (b, qi, 0)),  # q
                pl.BlockSpec((None, Kp, hw), lambda b, qi: (b, 0, 0)),   # V^T (resident over qi)
                pl.BlockSpec((None, hw, Kp), lambda b, qi: (b, 0, 0)),   # V bf16 (resident)
                pl.BlockSpec((None, 2, hw), lambda b, qi: (b, 0, 0)),    # scale/mm
            ],
            out_specs=pl.BlockSpec((None, tq, Kp), lambda b, qi: (b, qi, 0)),
        ),
        compiler_params=pltpu.CompilerParams(
            dimension_semantics=("parallel", "parallel"),
            vmem_limit_bytes=vmem_limit),
        cost_estimate=cost,
    )(q, vt, v_bf16, sc)

    # single-pass overlap-add (the /9 was folded into the kernel)
    shift = _col2im_conv(t[:, :, :K], h, w, C2, k, pad)
    return jnp.concatenate([former, latter, shift], axis=1)


# ----------------------------------------------------------------------------
# Soft shift: pure-lax reference path (independent conv-based formulation)
# ----------------------------------------------------------------------------
def _soft_shift_reference(feat, latter_win, den, mm, shift_sz):
    B, C, h, w = feat.shape
    C2 = C // 2
    k = shift_sz
    pad = k // 2
    former = feat[:, :C2]
    latter = feat[:, C2:]
    win_normed = latter_win / den[:, :, None, None, None]
    outs = []
    for b in range(B):
        f = former[b:b + 1]
        wn = win_normed[b]                                    # (hw, C2, k, k)
        y = lax.conv_general_dilated(
            f, wn, (1, 1), [(pad, pad), (pad, pad)],
            dimension_numbers=('NCHW', 'OIHW', 'NCHW'),
            precision=lax.Precision.HIGHEST)                  # (1, hw, h, w)
        mmb = mm[b].reshape(1, h * w, 1, 1)
        y = y * mmb
        cos = jax.nn.softmax(y * 10.0, axis=1) * mmb
        wt = jnp.flip(latter_win[b], (2, 3)).transpose(1, 0, 2, 3)  # (C2, hw, k, k)
        pp = k - 1 - pad
        sh = lax.conv_general_dilated(
            cos, wt, (1, 1), [(pp, pp), (pp, pp)],
            dimension_numbers=('NCHW', 'OIHW', 'NCHW'),
            precision=lax.Precision.HIGHEST) / 9.0
        outs.append(sh)
    shift = jnp.concatenate(outs, axis=0)
    return jnp.concatenate([former, latter, shift], axis=1)


def soft_shift(feat, mask, *, shift_sz=3, mask_thred=1, use_pallas=True):
    latter_win, den, mm = _shift_prepare(feat, mask, shift_sz, mask_thred)
    if use_pallas:
        return _soft_shift_pallas(feat, latter_win, den, mm, shift_sz)
    return _soft_shift_reference(feat, latter_win, den, mm, shift_sz)


# ----------------------------------------------------------------------------
# Standard-layer glue (Conv2d / ConvTranspose2d / BatchNorm2d / activations)
# ----------------------------------------------------------------------------
def _leaky_relu(x, slope):
    return jnp.where(x > 0, x, slope * x)


def _conv2d(x, w, b, *, stride, padding):
    y = lax.conv_general_dilated(
        x, w, (stride, stride), [(padding, padding), (padding, padding)],
        dimension_numbers=('NCHW', 'OIHW', 'NCHW'),
        precision=lax.Precision.HIGHEST)
    return y + b.reshape(1, -1, 1, 1)


def _conv_transpose2d(x, w, b, *, stride, padding):
    # w in PyTorch ConvTranspose2d layout: (in_ch, out_ch, kH, kW)
    k = w.shape[2]
    wf = jnp.flip(w, (2, 3)).transpose(1, 0, 2, 3)
    pp = k - 1 - padding
    y = lax.conv_general_dilated(
        x, wf, (1, 1), [(pp, pp), (pp, pp)], lhs_dilation=(stride, stride),
        dimension_numbers=('NCHW', 'OIHW', 'NCHW'),
        precision=lax.Precision.HIGHEST)
    return y + b.reshape(1, -1, 1, 1)


def _batchnorm2d(x, gamma, beta, eps=1e-5):
    # training-mode forward of a freshly-initialized BatchNorm2d (batch stats)
    mean = jnp.mean(x, axis=(0, 2, 3), keepdims=True)
    var = jnp.var(x, axis=(0, 2, 3), keepdims=True)
    xhat = (x - mean) / jnp.sqrt(var + eps)
    return xhat * gamma.reshape(1, -1, 1, 1) + beta.reshape(1, -1, 1, 1)


# ----------------------------------------------------------------------------
# Full block forward
# ----------------------------------------------------------------------------
def block_forward(x, mask_feat, params, *, use_pallas=True):
    p = params
    # ---- down path of the middle block ----
    h1 = _leaky_relu(x, 0.2)
    h1 = _conv2d(h1, p['downconv_w'], p['downconv_b'], stride=2, padding=1)
    h1 = _batchnorm2d(h1, p['downnorm_g'], p['downnorm_b'])
    # ---- innermost submodule ----
    s1 = _leaky_relu(h1, 0.2)
    s1 = _conv2d(s1, p['sub_downconv_w'], p['sub_downconv_b'], stride=2, padding=1)
    s1 = jax.nn.relu(s1)
    s1 = _conv_transpose2d(s1, p['sub_upconv_w'], p['sub_upconv_b'], stride=2, padding=1)
    s1 = _batchnorm2d(s1, p['sub_upnorm_g'], p['sub_upnorm_b'])
    sub_out = jnp.concatenate([s1, h1], axis=1)       # innermost: cat([x_latter, x], 1)
    # ---- up path of the middle block ----
    u = jax.nn.relu(sub_out)                          # uprelu
    # InnerCos.forward is the identity (loss side-effect only)
    u = soft_shift(u, mask_feat, shift_sz=3, mask_thred=1, use_pallas=use_pallas)
    u = _conv_transpose2d(u, p['upconv_w'], p['upconv_b'], stride=2, padding=1)
    u = _batchnorm2d(u, p['upnorm_g'], p['upnorm_b'])
    # spatial dims always match x (k=4, s=2, p=1), so no F.interpolate needed
    return jnp.concatenate([u, x], axis=1)


fwd_pallas = jax.jit(functools.partial(block_forward, use_pallas=True))
fwd_ref = jax.jit(functools.partial(block_forward, use_pallas=False))


if __name__ == "__main__":
    B, input_nc, H, W = 2, 4, 16, 16
    inner_nc, outer_nc, sub_inner_nc = 8, 4, 16

    key = jax.random.PRNGKey(0)
    keys = jax.random.split(key, 10)

    def nrm(k, shape, scale=0.1):
        return scale * jax.random.normal(k, shape, dtype=jnp.float32)

    params = {
        'downconv_w': nrm(keys[0], (inner_nc, input_nc, 4, 4)),
        'downconv_b': nrm(keys[1], (inner_nc,)),
        'downnorm_g': jnp.ones((inner_nc,), jnp.float32),
        'downnorm_b': jnp.zeros((inner_nc,), jnp.float32),
        'sub_downconv_w': nrm(keys[2], (sub_inner_nc, inner_nc, 4, 4)),
        'sub_downconv_b': nrm(keys[3], (sub_inner_nc,)),
        'sub_upconv_w': nrm(keys[4], (sub_inner_nc, inner_nc, 4, 4)),   # ConvT: (in, out, kH, kW)
        'sub_upconv_b': nrm(keys[5], (inner_nc,)),
        'sub_upnorm_g': jnp.ones((inner_nc,), jnp.float32),
        'sub_upnorm_b': jnp.zeros((inner_nc,), jnp.float32),
        'upconv_w': nrm(keys[6], (3 * inner_nc, outer_nc, 4, 4)),       # ConvT: (in, out, kH, kW)
        'upconv_b': nrm(keys[7], (outer_nc,)),
        'upnorm_g': jnp.ones((outer_nc,), jnp.float32),
        'upnorm_b': jnp.zeros((outer_nc,), jnp.float32),
    }

    x = jax.random.normal(keys[8], (B, input_nc, H, W), dtype=jnp.float32)
    # feature-resolution inpainting mask (1 = hole), as util.cal_feat_mask would give
    fh, fw = H // 2, W // 2
    mask_feat = jnp.zeros((B, 1, fh, fw), jnp.float32).at[:, :, 2:6, 2:6].set(1.0)

    out = jax.block_until_ready(fwd_pallas(x, mask_feat, params))
    ref = jax.block_until_ready(fwd_ref(x, mask_feat, params))

    assert out.shape == (B, outer_nc + input_nc, H, W), out.shape
    # 1e-2 tolerance: the kernel uses bf16 MXU inputs for P@V (f32 accumulation)
    # and an approximate EUP reciprocal in the softmax, vs a HIGHEST-precision
    # f32 lax reference; measured deviation is well inside this band.
    assert jnp.allclose(out, ref, atol=1e-2, rtol=1e-2), float(
        jnp.max(jnp.abs(out - ref)))
    print("KERNEL_OK")
</pallas_src>

<mosaic_0001>
module attributes {stable_mosaic.version = 11 : i64} {
  func.func @_soft_shift_attention_kernel(%arg0: i32, %arg1: i32, %arg2: memref<1x64x128xf32, #tpu.memory_space<vmem>>, %arg3: memref<1x128x64xf32, #tpu.memory_space<vmem>>, %arg4: memref<1x64x128xbf16, #tpu.memory_space<vmem>>, %arg5: memref<1x2x64xf32, #tpu.memory_space<vmem>>, %arg6: memref<1x64x128xf32, #tpu.memory_space<vmem>>) attributes {dimension_semantics = [#tpu.dimension_semantics<parallel>, #tpu.dimension_semantics<parallel>], iteration_bounds = array<i64: 2, 1>, scalar_prefetch = 0 : i64, scratch_operands = 0 : i64, tpu.core_type = #tpu.core_type<tc>, window_params = [{transform_indices = @transform_0, window_bounds = array<i64: 1, 64, 128>}, {transform_indices = @transform_1, window_bounds = array<i64: 1, 128, 64>}, {transform_indices = @transform_2, window_bounds = array<i64: 1, 64, 128>}, {transform_indices = @transform_3, window_bounds = array<i64: 1, 2, 64>}, {transform_indices = @transform_4, window_bounds = array<i64: 1, 64, 128>}]} {
    %c0 = arith.constant 0 : index
    %c0_0 = arith.constant 0 : index
    %c0_1 = arith.constant 0 : index
    %0 = vector.load %arg5[%c0, %c0_0, %c0_1] : memref<1x2x64xf32, #tpu.memory_space<vmem>>, vector<1x1x64xf32>
    %1 = vector.shape_cast %0 : vector<1x1x64xf32> to vector<1x64xf32>
    %c0_2 = arith.constant 0 : index
    %c1 = arith.constant 1 : index
    %c0_3 = arith.constant 0 : index
    %2 = vector.load %arg5[%c0_2, %c1, %c0_3] : memref<1x2x64xf32, #tpu.memory_space<vmem>>, vector<1x1x64xf32>
    %3 = vector.shape_cast %2 : vector<1x1x64xf32> to vector<1x64xf32>
    %c0_4 = arith.constant 0 : index
    %c0_5 = arith.constant 0 : index
    %c0_6 = arith.constant 0 : index
    %4 = vector.load %arg2[%c0_4, %c0_5, %c0_6] : memref<1x64x128xf32, #tpu.memory_space<vmem>>, vector<1x64x128xf32>
    %5 = vector.shape_cast %4 : vector<1x64x128xf32> to vector<64x128xf32>
    %c0_7 = arith.constant 0 : index
    %c0_8 = arith.constant 0 : index
    %c0_9 = arith.constant 0 : index
    %6 = vector.load %arg3[%c0_7, %c0_8, %c0_9] : memref<1x128x64xf32, #tpu.memory_space<vmem>>, vector<1x128x64xf32>
    %7 = vector.shape_cast %6 : vector<1x128x64xf32> to vector<128x64xf32>
    %cst = arith.constant dense<0.000000e+00> : vector<64x64xf32>
    %8 = tpu.matmul %5, %7, %cst {dimension_numbers = #tpu.dot_dimension_numbers<[1], [0], [0], [1], [0, 0, 1, 1], [], []>} : vector<64x128xf32>, vector<128x64xf32>, vector<64x64xf32> -> vector<64x64xf32>
    %9 = vector.broadcast %1 : vector<1x64xf32> to vector<64x64xf32>
    %10 = arith.mulf %8, %9 : vector<64x64xf32>
    %cst_10 = arith.constant dense<0xFF800000> : vector<64xf32>
    %11 = vector.multi_reduction <maximumf>, %10, %cst_10 [1] : vector<64x64xf32> to vector<64xf32>
    %12 = vector.shape_cast %11 : vector<64xf32> to vector<64x1xf32>
    %13 = vector.broadcast %12 : vector<64x1xf32> to vector<64x64xf32>
    %14 = arith.subf %10, %13 : vector<64x64xf32>
    %15 = math.exp %14 : vector<64x64xf32>
    %cst_11 = arith.constant dense<0.000000e+00> : vector<64xf32>
    %16 = vector.multi_reduction <add>, %15, %cst_11 [1] : vector<64x64xf32> to vector<64xf32>
    %17 = vector.shape_cast %16 : vector<64xf32> to vector<64x1xf32>
    %18 = tpu.reciprocal %17 {approx = true} : vector<64x1xf32> -> vector<64x1xf32>
    %19 = vector.broadcast %18 : vector<64x1xf32> to vector<64x64xf32>
    %20 = arith.mulf %15, %19 : vector<64x64xf32>
    %21 = vector.broadcast %3 : vector<1x64xf32> to vector<64x64xf32>
    %22 = arith.mulf %20, %21 : vector<64x64xf32>
    %23 = arith.truncf %22 : vector<64x64xf32> to vector<64x64xbf16>
    %c0_12 = arith.constant 0 : index
    %c0_13 = arith.constant 0 : index
    %c0_14 = arith.constant 0 : index
    %24 = vector.load %arg4[%c0_12, %c0_13, %c0_14] : memref<1x64x128xbf16, #tpu.memory_space<vmem>>, vector<1x64x128xbf16>
    %25 = vector.shape_cast %24 : vector<1x64x128xbf16> to vector<64x128xbf16>
    %cst_15 = arith.constant dense<0.000000e+00> : vector<64x128xf32>
    %26 = tpu.matmul %23, %25, %cst_15 {dimension_numbers = #tpu.dot_dimension_numbers<[1], [0], [0], [1], [0, 0, 1, 1], [], []>} : vector<64x64xbf16>, vector<64x128xbf16>, vector<64x128xf32> -> vector<64x128xf32>
    %cst_16 = arith.constant 0.111111112 : f32
    %27 = vector.broadcast %cst_16 : f32 to vector<64x128xf32>
    %28 = arith.mulf %26, %27 : vector<64x128xf32>
    %c0_17 = arith.constant 0 : index
    %c0_18 = arith.constant 0 : index
    %c0_19 = arith.constant 0 : index
    %29 = vector.load %arg6[%c0_17, %c0_18, %c0_19] : memref<1x64x128xf32, #tpu.memory_space<vmem>>, vector<1x64x128xf32>
    %30 = vector.shape_cast %29 : vector<1x64x128xf32> to vector<64x128xf32>
    %31 = vector.shape_cast %28 : vector<64x128xf32> to vector<1x64x128xf32>
    tpu.vector_store %arg6[%c0_17, %c0_18, %c0_19], %31 {strides = array<i32>} : memref<1x64x128xf32, #tpu.memory_space<vmem>>, vector<1x64x128xf32>,
    return
  }
  func.func @transform_0(%arg0: i32, %arg1: i32) -> (i32, i32, i32) {
    %c0_i32 = arith.constant 0 : i32
    %c0_i32_0 = arith.constant 0 : i32
    return %arg0, %arg1, %c0_i32 : i32, i32, i32
  }
  func.func @transform_1(%arg0: i32, %arg1: i32) -> (i32, i32, i32) {
    %c0_i32 = arith.constant 0 : i32
    %c0_i32_0 = arith.constant 0 : i32
    %c0_i32_1 = arith.constant 0 : i32
    return %arg0, %c0_i32, %c0_i32_0 : i32, i32, i32
  }
  func.func @transform_2(%arg0: i32, %arg1: i32) -> (i32, i32, i32) {
    %c0_i32 = arith.constant 0 : i32
    %c0_i32_0 = arith.constant 0 : i32
    %c0_i32_1 = arith.constant 0 : i32
    return %arg0, %c0_i32, %c0_i32_0 : i32, i32, i32
  }
  func.func @transform_3(%arg0: i32, %arg1: i32) -> (i32, i32, i32) {
    %c0_i32 = arith.constant 0 : i32
    %c0_i32_0 = arith.constant 0 : i32
    %c0_i32_1 = arith.constant 0 : i32
    return %arg0, %c0_i32, %c0_i32_0 : i32, i32, i32
  }
  func.func @transform_4(%arg0: i32, %arg1: i32) -> (i32, i32, i32) {
    %c0_i32 = arith.constant 0 : i32
    %c0_i32_0 = arith.constant 0 : i32
    return %arg0, %arg1, %c0_i32 : i32, i32, i32
  }
}

</mosaic_0001>

<llo_original>
// kernel: block_forward.1
$region0: #{block_forward.1}
  #allocation0 [shape = 'u32[]', space=smem, size = 0x4, offset = 0x4, fixed_abs, tag = 'smem constant byte address 0x4 - core index']
  #allocation1 [shape = 'u32[144,128]{1,0:T(1,128)}', space=vmem, size = 0x12000, scoped, tag = 'internal scratch']
  %s0 = inlined_call_operand.vmem [shape: f32[2,64,128], index: 0, kind: input, shape index: {}]
  %s1 = inlined_call_operand.vmem [shape: f32[2,128,64], index: 1, kind: input, shape index: {}]
  %s2 = inlined_call_operand.vmem [shape: bf16[2,64,128], index: 2, kind: input, shape index: {}]
  %s3 = inlined_call_operand.vmem [shape: f32[2,2,64], index: 3, kind: input, shape index: {}]
  %s4 = inlined_call_operand.vmem [shape: f32[2,64,128], index: 4, kind: output, shape index: {}]
  %s5 = sld [smem:[#allocation0]]
  $region49: #{block_forward.1} parent=0
    _
  %s7 = ssub.s32 1, %s5
  %s8 = scalar_select 0, %s7, %s5
  loop: start=0, step=1, limit=4
  $region2: #{block_forward.1} parent=0 // loop_pre_header
    _
  $region3: #{block_forward.1} parent=0 // loop_header
    %s10 = sphi 0, %s14
    %p11 = scmp.ge.s32.totalorder %s10, 4
    %s17 = sphi 0, %s29
    %s18 = sphi 0, %s25
    %s19 = sphi 0, %s17
    %s20 = sphi 0, %s18
    %s21 = sphi 0, %s19
    %s22 = sphi 0, %s20
    %s34 = sphi 0, %s36
    %s37 = sphi 0, %s34
    %s38 = sphi 0, %s37
    %s54 = sphi 0, %s38
    %s60 = sphi 0, %s62
    %s63 = sphi 0, %s60
    %s64 = sphi 0, %s63
    %s80 = sphi 0, %s64
    %s86 = sphi 0, %s88
    %s89 = sphi 0, %s86
    %s90 = sphi 0, %s89
    %s106 = sphi 0, %s90
    %s112 = sphi 0, %s114
    %s115 = sphi 0, %s112
    %s116 = sphi 0, %s115
    %s132 = sphi 0, %s116
    %s140 = sphi 0, %s142
    %s143 = sphi 0, %s140
    %s144 = sphi 0, %s143
    %s160 = sphi 0, %s144
  $region4: #{block_forward.1} parent=0 // loop_header_branch
    %13 = sbr.rel (%p11) target = $region8
  $region5: #{block_forward.1} parent=0 // loop_body
    %s15 = ssub.s32 %s10, 1
    %s16 = ssub.s32 %s10, 2
    %s23 = sadd.s32 1, %s18
    %p24 = scmp.ge.s32.totalorder %s23, 1
    %s25 = scalar_select %p24, 0, %s23
    %s26 = sadd.s32 1, %s17
    %s27 = scalar_select %p24, %s26, %s17
    %p28 = scmp.ge.s32.totalorder %s27, 2
    %s29 = scalar_select %p28, 0, %s27
    %s30 = ssub.s32 %s17, %s29
    %s31 = ssub.s32 %s18, %s25
    %s32 = sor.u32 %s30, %s31
    %p33 = scmp.eq.s32.totalorder %s32, 0
    %s35 = sadd.s32 %s34, 1
    %s36 = scalar_select %p33, %s34, %s35
    %p39 = pneg %p33
    %p40 = scmp.eq.s32.totalorder %s10, 1
    %p41 = por %p39, %p40
    %p42 = scmp.ne.s32.totalorder %s34, %s37
    %p43 = scmp.eq.s32.totalorder %s10, 0
    %p44 = por %p42, %p43
    %p45 = scmp.ne.s32.totalorder %s34, %s37
    %p46 = scmp.eq.s32.totalorder %s15, 1
    %p47 = por %p45, %p46
    %p48 = scmp.ne.s32.totalorder %s37, %s38
    %p49 = scmp.eq.s32.totalorder %s15, 0
    %p50 = por %p48, %p49
    %p51 = scmp.ne.s32.totalorder %s37, %s38
    %p52 = scmp.eq.s32.totalorder %s16, 1
    %p53 = por %p51, %p52
    %p55 = scmp.ne.s32.totalorder %s38, %s54
    %p56 = scmp.eq.s32.totalorder %s16, 0
    %p57 = por %p55, %p56
    %s58 = ssub.s32 %s17, %s29
    %p59 = scmp.eq.s32.totalorder %s58, 0
    %s61 = sadd.s32 %s60, 1
    %s62 = scalar_select %p59, %s60, %s61
    %p65 = pneg %p59
    %p66 = scmp.eq.s32.totalorder %s10, 1
    %p67 = por %p65, %p66
    %p68 = scmp.ne.s32.totalorder %s60, %s63
    %p69 = scmp.eq.s32.totalorder %s10, 0
    %p70 = por %p68, %p69
    %p71 = scmp.ne.s32.totalorder %s60, %s63
    %p72 = scmp.eq.s32.totalorder %s15, 1
    %p73 = por %p71, %p72
    %p74 = scmp.ne.s32.totalorder %s63, %s64
    %p75 = scmp.eq.s32.totalorder %s15, 0
    %p76 = por %p74, %p75
    %p77 = scmp.ne.s32.totalorder %s63, %s64
    %p78 = scmp.eq.s32.totalorder %s16, 1
    %p79 = por %p77, %p78
    %p81 = scmp.ne.s32.totalorder %s64, %s80
    %p82 = scmp.eq.s32.totalorder %s16, 0
    %p83 = por %p81, %p82
    %s84 = ssub.s32 %s17, %s29
    %p85 = scmp.eq.s32.totalorder %s84, 0
    %s87 = sadd.s32 %s86, 1
    %s88 = scalar_select %p85, %s86, %s87
    %p91 = pneg %p85
    %p92 = scmp.eq.s32.totalorder %s10, 1
    %p93 = por %p91, %p92
    %p94 = scmp.ne.s32.totalorder %s86, %s89
    %p95 = scmp.eq.s32.totalorder %s10, 0
    %p96 = por %p94, %p95
    %p97 = scmp.ne.s32.totalorder %s86, %s89
    %p98 = scmp.eq.s32.totalorder %s15, 1
    %p99 = por %p97, %p98
    %p100 = scmp.ne.s32.totalorder %s89, %s90
    %p101 = scmp.eq.s32.totalorder %s15, 0
    %p102 = por %p100, %p101
    %p103 = scmp.ne.s32.totalorder %s89, %s90
    %p104 = scmp.eq.s32.totalorder %s16, 1
    %p105 = por %p103, %p104
    %p107 = scmp.ne.s32.totalorder %s90, %s106
    %p108 = scmp.eq.s32.totalorder %s16, 0
    %p109 = por %p107, %p108
    %s110 = ssub.s32 %s17, %s29
    %p111 = scmp.eq.s32.totalorder %s110, 0
    %s113 = sadd.s32 %s112, 1
    %s114 = scalar_select %p111, %s112, %s113
    %p117 = pneg %p111
    %p118 = scmp.eq.s32.totalorder %s10, 1
    %p119 = por %p117, %p118
    %p120 = scmp.ne.s32.totalorder %s112, %s115
    %p121 = scmp.eq.s32.totalorder %s10, 0
    %p122 = por %p120, %p121
    %p123 = scmp.ne.s32.totalorder %s112, %s115
    %p124 = scmp.eq.s32.totalorder %s15, 1
    %p125 = por %p123, %p124
    %p126 = scmp.ne.s32.totalorder %s115, %s116
    %p127 = scmp.eq.s32.totalorder %s15, 0
    %p128 = por %p126, %p127
    %p129 = scmp.ne.s32.totalorder %s115, %s116
    %p130 = scmp.eq.s32.totalorder %s16, 1
    %p131 = por %p129, %p130
    %p133 = scmp.ne.s32.totalorder %s116, %s132
    %p134 = scmp.eq.s32.totalorder %s16, 0
    %p135 = por %p133, %p134
    %s136 = ssub.s32 %s17, %s29
    %s137 = ssub.s32 %s18, %s25
    %s138 = sor.u32 %s136, %s137
    %p139 = scmp.eq.s32.totalorder %s138, 0
    %s141 = sadd.s32 %s140, 1
    %s142 = scalar_select %p139, %s140, %s141
    %p145 = pneg %p139
    %p146 = scmp.eq.s32.totalorder %s10, 1
    %p147 = por %p145, %p146
    %p148 = scmp.ne.s32.totalorder %s140, %s143
    %p149 = scmp.eq.s32.totalorder %s10, 0
    %p150 = por %p148, %p149
    %p151 = scmp.ne.s32.totalorder %s140, %s143
    %p152 = scmp.eq.s32.totalorder %s15, 1
    %p153 = por %p151, %p152
    %p154 = scmp.ne.s32.totalorder %s143, %s144
    %p155 = scmp.eq.s32.totalorder %s15, 0
    %p156 = por %p154, %p155
    %p157 = scmp.ne.s32.totalorder %s143, %s144
    %p158 = scmp.eq.s32.totalorder %s16, 1
    %p159 = por %p157, %p158
    %p161 = scmp.ne.s32.totalorder %s144, %s160
    %p162 = scmp.eq.s32.totalorder %s16, 0
    %p163 = por %p161, %p162
    %p164 = scmp.le.s32.totalorder 1, %s10
    %p165 = scmp.lt.s32.totalorder %s10, 3
    %p166 = pnand %p164, %p165
    %p167 = pneg %p166
    // Predicated region
    $region9: #{block_forward.1} parent=5 // pred_check
      _
    $region10: #{block_forward.1} parent=5 // pred_check_branch
      %169 = sbr.rel (%p166) target = $region12
    $region11: #{block_forward.1} parent=5 // pred_region
      %s170 = ssub.s32 %s10, 1
    $region12: #{block_forward.1} parent=5 // pred_fallthru
      _
    %p171 = scmp.lt.s32.totalorder %s10, 2
    // Predicated region
    $region13: #{block_forward.1} parent=5 // pred_check
      %p172 = pneg %p171
    $region14: #{block_forward.1} parent=5 // pred_check_branch
      %174 = sbr.rel (%p172) target = $region16
    $region15: #{block_forward.1} parent=5 // pred_region
      // Predicated region
      $region17: #{block_forward.1} parent=15 // pred_check
        %p175 = pneg %p44
      $region18: #{block_forward.1} parent=15 // pred_check_branch
        %177 = sbr.rel (%p175) target = $region20
      $region19: #{block_forward.1} parent=15 // pred_region
        %s178 = smul.u32 8, %s18
        %p179 = scmp.lt.s32.totalorder %s17, 1
        %s180 = scalar_select %p179, %s17, 1
        %p181 = scmp.lt.s32.totalorder %s178, 7
        %s182 = scalar_select %p181, %s178, 7
        %s183 = smul.addr %s180, 8
        %s184 = sadd.s32 %s182, %s183
        %s185 = smul.addr %s184, 8
        %s186 = scalar_lea.vmem %s0, %s185
        %s187 = smul.u32 8, %s18
      $region20: #{block_forward.1} parent=15 // pred_fallthru
        _
      // Predicated region
      $region21: #{block_forward.1} parent=15 // pred_check
        %p188 = pneg %p70
      $region22: #{block_forward.1} parent=15 // pred_check_branch
        %190 = sbr.rel (%p188) target = $region24
      $region23: #{block_forward.1} parent=15 // pred_region
        %p191 = scmp.lt.s32.totalorder %s17, 1
        %s192 = scalar_select %p191, %s17, 1
        %s193 = smul.addr %s192, 16
        %s194 = smul.addr %s193, 8
        %s195 = scalar_lea.vmem %s1, %s194
      $region24: #{block_forward.1} parent=15 // pred_fallthru
        _
      // Predicated region
      $region25: #{block_forward.1} parent=15 // pred_check
        %p196 = pneg %p96
      $region26: #{block_forward.1} parent=15 // pred_check_branch
        %198 = sbr.rel (%p196) target = $region28
      $region27: #{block_forward.1} parent=15 // pred_region
        %p199 = scmp.lt.s32.totalorder %s17, 1
        %s200 = scalar_select %p199, %s17, 1
        %s201 = smul.addr %s200, 8
        %s202 = smul.addr %s201, 4
        %s203 = scalar_lea.vmem %s2, %s202
      $region28: #{block_forward.1} parent=15 // pred_fallthru
        _
      // Predicated region
      $region29: #{block_forward.1} parent=15 // pred_check
        %p204 = pneg %p122
      $region30: #{block_forward.1} parent=15 // pred_check_branch
        %206 = sbr.rel (%p204) target = $region32
      $region31: #{block_forward.1} parent=15 // pred_region
        %p207 = scmp.lt.s32.totalorder %s17, 1
        %s208 = scalar_select %p207, %s17, 1
        %s209 = smul.addr %s208, 2
        %s210 = scalar_lea.vmem %s3, %s209
      $region32: #{block_forward.1} parent=15 // pred_fallthru
        _
    $region16: #{block_forward.1} parent=5 // pred_fallthru
      _
    %p211 = scmp.le.s32.totalorder 1, %s10
    %p212 = scmp.lt.s32.totalorder %s10, 3
    %p213 = pnand %p211, %p212
    %p214 = pneg %p213
    // Predicated region
    $region33: #{block_forward.1} parent=5 // pred_check
      _
    $region34: #{block_forward.1} parent=5 // pred_check_branch
      %216 = sbr.rel (%p213) target = $region36
    $region35: #{block_forward.1} parent=5 // pred_region
      %s217 = ssub.s32 %s10, 1
      %s218 = smul.u32 8, %s20
      %p219 = scmp.lt.s32.totalorder %s19, 1
      %s220 = scalar_select %p219, %s19, 1
      %p221 = scmp.lt.s32.totalorder %s218, 7
      %s222 = scalar_select %p221, %s218, 7
      %s223 = smul.addr %s220, 8
      %s224 = sadd.s32 %s222, %s223
      %s225 = smul.addr %s224, 8
      %s226 = scalar_lea.vmem %s0, %s225
      %p227 = pneg %p50
      %p228 = pneg %p47
      %p229 = scmp.lt.s32.totalorder %s19, 1
      %s230 = scalar_select %p229, %s19, 1
      %s231 = smul.addr %s230, 16
      %s232 = smul.addr %s231, 8
      %s233 = scalar_lea.vmem %s1, %s232
      %p234 = pneg %p76
      %p235 = pneg %p73
      %p236 = scmp.lt.s32.totalorder %s19, 1
      %s237 = scalar_select %p236, %s19, 1
      %s238 = smul.addr %s237, 8
      %s239 = smul.addr %s238, 4
      %s240 = scalar_lea.vmem %s2, %s239
      %p241 = pneg %p102
      %p242 = pneg %p99
      %p243 = scmp.lt.s32.totalorder %s19, 1
      %s244 = scalar_select %p243, %s19, 1
      %s245 = smul.addr %s244, 2
      %s246 = scalar_lea.vmem %s3, %s245
      %p247 = pneg %p128
      %p248 = pneg %p125
      %p249 = pneg %p156
      %p250 = pneg %p153
      %s251 = smul.u32 8, %s20
      %p252 = scmp.lt.s32.totalorder %s19, 1
      %s253 = scalar_select %p252, %s19, 1
      %p254 = scmp.lt.s32.totalorder %s251, 7
      %s255 = scalar_select %p254, %s251, 7
      %s256 = smul.addr %s253, 8
      %s257 = sadd.s32 %s255, %s256
      %s258 = smul.addr %s257, 8
      %s259 = scalar_lea.vmem %s4, %s258
      %s260 = smul.u32 8, %s20
      %p261 = scmp.lt.s32.totalorder %s19, 1
      %s262 = scalar_select %p261, %s19, 1
      %p263 = scmp.lt.s32.totalorder %s260, 7
      %s264 = scalar_select %p263, %s260, 7
      %s265 = smul.addr %s262, 8
      %s266 = sadd.s32 %s264, %s265
      %s267 = smul.addr %s266, 8
      %s268 = scalar_lea.vmem %s0, %s267
      %s269 = smul.u32 8, %s20
      %p270 = scmp.lt.s32.totalorder %s19, 1
      %s271 = scalar_select %p270, %s19, 1
      %s272 = smul.addr %s271, 16
      %s273 = smul.addr %s272, 8
      %s274 = scalar_lea.vmem %s1, %s273
      %p275 = scmp.lt.s32.totalorder %s19, 1
      %s276 = scalar_select %p275, %s19, 1
      %s277 = smul.addr %s276, 8
      %s278 = smul.addr %s277, 4
      %s279 = scalar_lea.vmem %s2, %s278
      %p280 = scmp.lt.s32.totalorder %s19, 1
      %s281 = scalar_select %p280, %s19, 1
      %s282 = smul.addr %s281, 2
      %s283 = scalar_lea.vmem %s3, %s282
      %s284 = smul.u32 8, %s20
      %p285 = scmp.lt.s32.totalorder %s19, 1
      %s286 = scalar_select %p285, %s19, 1
      %p287 = scmp.lt.s32.totalorder %s284, 7
      %s288 = scalar_select %p287, %s284, 7
      %s289 = smul.addr %s286, 8
      %s290 = sadd.s32 %s288, %s289
      %s291 = smul.addr %s290, 8
      %s292 = scalar_lea.vmem %s4, %s291
      %s293 = smul.u32 8, %s20
      %v295 = vld [vmem:[%s283] sm:$0x1]
      %v296 = vld [vmem:[%s283 + $0x1] sm:$0x1]
      %v297 = vld [vmem:[%s268] sm:$0xff]
      %v298 = vld [vmem:[%s268 + $0x8] sm:$0xff]
      %v299 = vld [vmem:[%s268 + $0x10] sm:$0xff]
      %v300 = vld [vmem:[%s268 + $0x18] sm:$0xff]
      %v301 = vld [vmem:[%s268 + $0x20] sm:$0xff]
      %v302 = vld [vmem:[%s268 + $0x28] sm:$0xff]
      %v303 = vld [vmem:[%s268 + $0x30] sm:$0xff]
      %v304 = vld [vmem:[%s268 + $0x38] sm:$0xff]
      %v305 = vld [vmem:[%s274] sm:$0xff]
      %v306 = vld [vmem:[%s274 + $0x8] sm:$0xff]
      %v307 = vld [vmem:[%s274 + $0x10] sm:$0xff]
      %v308 = vld [vmem:[%s274 + $0x18] sm:$0xff]
      %v309 = vld [vmem:[%s274 + $0x20] sm:$0xff]
      %v310 = vld [vmem:[%s274 + $0x28] sm:$0xff]
      %v311 = vld [vmem:[%s274 + $0x30] sm:$0xff]
      %v312 = vld [vmem:[%s274 + $0x38] sm:$0xff]
      %v313 = vld [vmem:[%s274 + $0x40] sm:$0xff]
      %v314 = vld [vmem:[%s274 + $0x48] sm:$0xff]
      %v315 = vld [vmem:[%s274 + $0x50] sm:$0xff]
      %v316 = vld [vmem:[%s274 + $0x58] sm:$0xff]
      %v317 = vld [vmem:[%s274 + $0x60] sm:$0xff]
      %v318 = vld [vmem:[%s274 + $0x68] sm:$0xff]
      %v319 = vld [vmem:[%s274 + $0x70] sm:$0xff]
      %v320 = vld [vmem:[%s274 + $0x78] sm:$0xff]
      %321 = vmatprep.subr.mxu0 0.0
      %322 = vmatpush1.msra.mxu0 %v305
      %323 = vmatprep.subr.mxu0 0.0
      %324 = vmatpush1.msra.mxu0 %v306
      %325 = vmatprep.subr.mxu0 0.0
      %326 = vmatpush1.msra.mxu0 %v307
      %327 = vmatprep.subr.mxu0 0.0
      %328 = vmatpush1.msra.mxu0 %v308
      %329 = vmatprep.subr.mxu0 0.0
      %330 = vmatpush1.msra.mxu0 %v309
      %331 = vmatprep.subr.mxu0 0.0
      %332 = vmatpush1.msra.mxu0 %v310
      %333 = vmatprep.subr.mxu0 0.0
      %334 = vmatpush1.msra.mxu0 %v311
      %335 = vmatprep.subr.mxu0 0.0
      %336 = vmatpush1.msra.mxu0 %v312
      %337 = vmatprep.subr.mxu0 0.0
      %338 = vmatpush1.msra.mxu0 %v313
      %339 = vmatprep.subr.mxu0 0.0
      %340 = vmatpush1.msra.mxu0 %v314
      %341 = vmatprep.subr.mxu0 0.0
      %342 = vmatpush1.msra.mxu0 %v315
      %343 = vmatprep.subr.mxu0 0.0
      %344 = vmatpush1.msra.mxu0 %v316
      %345 = vmatprep.subr.mxu0 0.0
      %346 = vmatpush1.msra.mxu0 %v317
      %347 = vmatprep.subr.mxu0 0.0
      %348 = vmatpush1.msra.mxu0 %v318
      %349 = vmatprep.subr.mxu0 0.0
      %350 = vmatpush1.msra.mxu0 %v319
      %351 = vmatprep.subr.mxu0 0.0
      %352 = vmatpush1.msra.mxu0 %v320
      %353 = vmatprep.subr.mxu0 0.0
      %354 = vmatpush1.msra.mxu0 0.0
      %355 = vmatprep.subr.mxu0 0.0
      %356 = vmatpush1.msra.mxu0 0.0
      %357 = vmatprep.subr.mxu0 0.0
      %358 = vmatpush1.msra.mxu0 0.0
      %359 = vmatprep.subr.mxu0 0.0
      %360 = vmatpush1.msra.mxu0 0.0
      %361 = vmatprep.subr.mxu0 0.0
      %362 = vmatpush1.msra.mxu0 0.0
      %363 = vmatprep.subr.mxu0 0.0
      %364 = vmatpush1.msra.mxu0 0.0
      %365 = vmatprep.subr.mxu0 0.0
      %366 = vmatpush1.msra.mxu0 0.0
      %367 = vmatprep.subr.mxu0 0.0
      %368 = vmatpush1.msra.mxu0 0.0
      %369 = vmatprep.subr.mxu0 0.0
      %370 = vmatpush1.msra.mxu0 0.0
      %371 = vmatprep.subr.mxu0 0.0
      %372 = vmatpush1.msra.mxu0 0.0
      %373 = vmatprep.subr.mxu0 0.0
      %374 = vmatpush1.msra.mxu0 0.0
      %375 = vmatprep.subr.mxu0 0.0
      %376 = vmatpush1.msra.mxu0 0.0
      %377 = vmatprep.subr.mxu0 0.0
      %378 = vmatpush1.msra.mxu0 0.0
      %379 = vmatprep.subr.mxu0 0.0
      %380 = vmatpush1.msra.mxu0 0.0
      %381 = vmatprep.subr.mxu0 0.0
      %382 = vmatpush1.msra.mxu0 0.0
      %383 = vmatprep.subr.mxu0 0.0
      %384 = vmatpush1.msra.mxu0 0.0
      %385 = vmatprep.mubr.f32.mxu0 0.0
      %386 = vmatmul.mubr.f32.gmra.mrb[0].mxu0 %v297
      %v387 = vpop.f32.mrb[0].mxu0
      %v388 = vadd.f32 0.0, %v387
      %v389 = vpop.f32.mrb[0].mxu0
      %390 = vmatprep.mubr.f32.mxu0 0.0
      %391 = vmatmul.mubr.f32.gmra.mrb[0].mxu0 %v298
      %v392 = vpop.f32.mrb[0].mxu0
      %v393 = vadd.f32 0.0, %v392
      %v394 = vpop.f32.mrb[0].mxu0
      %395 = vmatprep.mubr.f32.mxu0 0.0
      %396 = vmatmul.mubr.f32.gmra.mrb[0].mxu0 %v299
      %v397 = vpop.f32.mrb[0].mxu0
      %v398 = vadd.f32 0.0, %v397
      %v399 = vpop.f32.mrb[0].mxu0
      %400 = vmatprep.mubr.f32.mxu0 0.0
      %401 = vmatmul.mubr.f32.gmra.mrb[0].mxu0 %v300
      %v402 = vpop.f32.mrb[0].mxu0
      %v403 = vadd.f32 0.0, %v402
      %v404 = vpop.f32.mrb[0].mxu0
      %405 = vmatprep.mubr.f32.mxu0 0.0
      %406 = vmatmul.mubr.f32.gmra.mrb[0].mxu0 %v301
      %v407 = vpop.f32.mrb[0].mxu0
      %v408 = vadd.f32 0.0, %v407
      %v409 = vpop.f32.mrb[0].mxu0
      %410 = vmatprep.mubr.f32.mxu0 0.0
      %411 = vmatmul.mubr.f32.gmra.mrb[0].mxu0 %v302
      %v412 = vpop.f32.mrb[0].mxu0
      %v413 = vadd.f32 0.0, %v412
      %v414 = vpop.f32.mrb[0].mxu0
      %415 = vmatprep.mubr.f32.mxu0 0.0
      %416 = vmatmul.mubr.f32.gmra.mrb[0].mxu0 %v303
      %v417 = vpop.f32.mrb[0].mxu0
      %v418 = vadd.f32 0.0, %v417
      %v419 = vpop.f32.mrb[0].mxu0
      %420 = vmatprep.mubr.f32.mxu0 0.0
      %421 = vmatmul.mubr.f32.gmra.mrb[0].mxu0 %v304
      %v422 = vpop.f32.mrb[0].mxu0
      %v423 = vadd.f32 0.0, %v422
      %v424 = vpop.f32.mrb[0].mxu0
      %425 = vdwg.mxu0
      %v426 = vlaneseq
      %v427 = vshrl.u32 %v426, 7
      %v428 = vsub.s32 0, %v427
      %v429 = vrot.slane %v295, %v428
      %v430 = vmul.f32 %v388, %v429
      %v431 = vmul.f32 %v393, %v429
      %v432 = vmul.f32 %v398, %v429
      %v433 = vmul.f32 %v403, %v429
      %v434 = vmul.f32 %v408, %v429
      %v435 = vmul.f32 %v413, %v429
      %v436 = vmul.f32 %v418, %v429
      %v437 = vmul.f32 %v423, %v429
      %vm438 = vcmask 523264
      %v439 = vsel %vm438, %v430, -inf
      %440 = vmax.xlane.f32.xlu0 %v439
      %v441 = vpop.xlane.xlu0 %440
      %v442 = vsel %vm438, %v431, -inf
      %443 = vmax.xlane.f32.xlu0 %v442
      %v444 = vpop.xlane.xlu0 %443
      %v445 = vsel %vm438, %v432, -inf
      %446 = vmax.xlane.f32.xlu0 %v445
      %v447 = vpop.xlane.xlu0 %446
      %v448 = vsel %vm438, %v433, -inf
      %449 = vmax.xlane.f32.xlu0 %v448
      %v450 = vpop.xlane.xlu0 %449
      %v451 = vsel %vm438, %v434, -inf
      %452 = vmax.xlane.f32.xlu0 %v451
      %v453 = vpop.xlane.xlu0 %452
      %v454 = vsel %vm438, %v435, -inf
      %455 = vmax.xlane.f32.xlu0 %v454
      %v456 = vpop.xlane.xlu0 %455
      %v457 = vsel %vm438, %v436, -inf
      %458 = vmax.xlane.f32.xlu0 %v457
      %v459 = vpop.xlane.xlu0 %458
      %v460 = vsel %vm438, %v437, -inf
      %461 = vmax.xlane.f32.xlu0 %v460
      %v462 = vpop.xlane.xlu0 %461
      %v463 = vsub.f32 %v430, %v441
      %v464 = vsub.f32 %v431, %v444
      %v465 = vsub.f32 %v432, %v447
      %v466 = vsub.f32 %v433, %v450
      %v467 = vsub.f32 %v434, %v453
      %v468 = vsub.f32 %v435, %v456
      %v469 = vsub.f32 %v436, %v459
      %v470 = vsub.f32 %v437, %v462
      %v471 = vmul.f32 %v463, 1.442695
      %v472 = vpow.pop %v471
      %v473 = vmul.f32 %v464, 1.442695
      %v474 = vpow.pop %v473
      %v475 = vmul.f32 %v465, 1.442695
      %v476 = vpow.pop %v475
      %v477 = vmul.f32 %v466, 1.442695
      %v478 = vpow.pop %v477
      %v479 = vmul.f32 %v467, 1.442695
      %v480 = vpow.pop %v479
      %v481 = vmul.f32 %v468, 1.442695
      %v482 = vpow.pop %v481
      %v483 = vmul.f32 %v469, 1.442695
      %v484 = vpow.pop %v483
      %v485 = vmul.f32 %v470, 1.442695
      %v486 = vpow.pop %v485
      %v487 = vsel %vm438, %v472, 0.0
      %488 = vadd.xlane.f32.xlu0 %v487
      %v489 = vpop.xlane.xlu0 %488
      %v490 = vsel %vm438, %v474, 0.0
      %491 = vadd.xlane.f32.xlu0 %v490
      %v492 = vpop.xlane.xlu0 %491
      %v493 = vsel %vm438, %v476, 0.0
      %494 = vadd.xlane.f32.xlu0 %v493
      %v495 = vpop.xlane.xlu0 %494
      %v496 = vsel %vm438, %v478, 0.0
      %497 = vadd.xlane.f32.xlu0 %v496
      %v498 = vpop.xlane.xlu0 %497
      %v499 = vsel %vm438, %v480, 0.0
      %500 = vadd.xlane.f32.xlu0 %v499
      %v501 = vpop.xlane.xlu0 %500
      %v502 = vsel %vm438, %v482, 0.0
      %503 = vadd.xlane.f32.xlu0 %v502
      %v504 = vpop.xlane.xlu0 %503
      %v505 = vsel %vm438, %v484, 0.0
      %506 = vadd.xlane.f32.xlu0 %v505
      %v507 = vpop.xlane.xlu0 %506
      %v508 = vsel %vm438, %v486, 0.0
      %509 = vadd.xlane.f32.xlu0 %v508
      %v510 = vpop.xlane.xlu0 %509
      %v511 = vrcp.pop %v489
      %v512 = vrcp.pop %v492
      %v513 = vrcp.pop %v495
      %v514 = vrcp.pop %v498
      %v515 = vrcp.pop %v501
      %v516 = vrcp.pop %v504
      %v517 = vrcp.pop %v507
      %v518 = vrcp.pop %v510
      %v519 = vmul.f32 %v472, %v511
      %v520 = vmul.f32 %v474, %v512
      %v521 = vmul.f32 %v476, %v513
      %v522 = vmul.f32 %v478, %v514
      %v523 = vmul.f32 %v480, %v515
      %v524 = vmul.f32 %v482, %v516
      %v525 = vmul.f32 %v484, %v517
      %v526 = vmul.f32 %v486, %v518
      %v527 = vlaneseq
      %v528 = vshrl.u32 %v527, 7
      %v529 = vsub.s32 0, %v528
      %v530 = vrot.slane %v296, %v529
      %v531 = vmul.f32 %v519, %v530
      %v532 = vmul.f32 %v520, %v530
      %v533 = vmul.f32 %v521, %v530
      %v534 = vmul.f32 %v522, %v530
      %v535 = vmul.f32 %v523, %v530
      %v536 = vmul.f32 %v524, %v530
      %v537 = vmul.f32 %v525, %v530
      %v538 = vmul.f32 %v526, %v530
      %v539 = vpack.c.bf16 %v532, %v531
      %v540 = vpack.c.bf16 %v534, %v533
      %v541 = vpack.c.bf16 %v536, %v535
      %v542 = vpack.c.bf16 %v538, %v537
      %v543 = vld [vmem:[%s279] sm:$0xf]
      %v544 = vld [vmem:[%s279 + $0x4] sm:$0xf]
      %v545 = vld [vmem:[%s279 + $0x8] sm:$0xf]
      %v546 = vld [vmem:[%s279 + $0xc] sm:$0xf]
      %v547 = vld [vmem:[%s279 + $0x10] sm:$0xf]
      %v548 = vld [vmem:[%s279 + $0x14] sm:$0xf]
      %v549 = vld [vmem:[%s279 + $0x18] sm:$0xf]
      %v550 = vld [vmem:[%s279 + $0x1c] sm:$0xf]
      %v559 = vunpack.c.l.b16 %v543
      %v560 = vunpack.c.l.b16 %v544
      %v561 = vunpack.c.l.b16 %v545
      %v562 = vunpack.c.l.b16 %v546
      %v563 = vunpack.c.l.b16 %v547
      %v564 = vunpack.c.l.b16 %v548
      %v565 = vunpack.c.l.b16 %v549
      %v566 = vunpack.c.l.b16 %v550
      %v567 = vpack.c.b16 %v560, %v559
      %v568 = vpack.c.b16 %v562, %v561
      %v569 = vpack.c.b16 %v564, %v563
      %v570 = vpack.c.b16 %v566, %v565
      %v576 = vsel %vm438, %v539, 0
      %v579 = vsel %vm438, %v540, 0
      %v582 = vsel %vm438, %v541, 0
      %v585 = vsel %vm438, %v542, 0
      %587 = vmatprep.subr.bf16.mxu0 0
      %588 = vmatpush1.bf16.msra.mxu0 %v567
      %589 = vmatprep.subr.bf16.mxu0 0
      %590 = vmatpush1.bf16.msra.mxu0 %v568
      %591 = vmatprep.subr.bf16.mxu0 0
      %592 = vmatpush1.bf16.msra.mxu0 %v569
      %593 = vmatprep.subr.bf16.mxu0 0
      %594 = vmatpush1.bf16.msra.mxu0 %v570
      %595 = vmatprep.subr.bf16.mxu0 0
      %596 = vmatpush1.bf16.msra.mxu0 0
      %597 = vmatprep.subr.bf16.mxu0 0
      %598 = vmatpush1.bf16.msra.mxu0 0
      %599 = vmatprep.subr.bf16.mxu0 0
      %600 = vmatpush1.bf16.msra.mxu0 0
      %601 = vmatprep.subr.bf16.mxu0 0
      %602 = vmatpush1.bf16.msra.mxu0 0
      %603 = vmatprep.subr.bf16.mxu0 0
      %604 = vmatpush1.bf16.msra.mxu0 0
      %605 = vmatprep.subr.bf16.mxu0 0
      %606 = vmatpush1.bf16.msra.mxu0 0
      %607 = vmatprep.subr.bf16.mxu0 0
      %608 = vmatpush1.bf16.msra.mxu0 0
      %609 = vmatprep.subr.bf16.mxu0 0
      %610 = vmatpush1.bf16.msra.mxu0 0
      %611 = vmatprep.subr.bf16.mxu0 0
      %612 = vmatpush1.bf16.msra.mxu0 0
      %613 = vmatprep.subr.bf16.mxu0 0
      %614 = vmatpush1.bf16.msra.mxu0 0
      %615 = vmatprep.subr.bf16.mxu0 0
      %616 = vmatpush1.bf16.msra.mxu0 0
      %617 = vmatprep.subr.bf16.mxu0 0
      %618 = vmatpush1.bf16.msra.mxu0 0
      %619 = vmatprep.mubr.bf16.mxu0 0
      %620 = vmatmul.mubr.bf16.gmra.mrb[0].mxu0 %v576
      %v621 = vpop.f32.mrb[0].mxu0
      %v622 = vadd.f32 0.0, %v621
      %v623 = vpop.f32.mrb[0].mxu0
      %v624 = vpop.f32.mrb[0].mxu0
      %v625 = vadd.f32 0.0, %v624
      %v626 = vpop.f32.mrb[0].mxu0
      %627 = vmatprep.mubr.bf16.mxu0 0
      %628 = vmatmul.mubr.bf16.gmra.mrb[0].mxu0 %v579
      %v629 = vpop.f32.mrb[0].mxu0
      %v630 = vadd.f32 0.0, %v629
      %v631 = vpop.f32.mrb[0].mxu0
      %v632 = vpop.f32.mrb[0].mxu0
      %v633 = vadd.f32 0.0, %v632
      %v634 = vpop.f32.mrb[0].mxu0
      %635 = vmatprep.mubr.bf16.mxu0 0
      %636 = vmatmul.mubr.bf16.gmra.mrb[0].mxu0 %v582
      %v637 = vpop.f32.mrb[0].mxu0
      %v638 = vadd.f32 0.0, %v637
      %v639 = vpop.f32.mrb[0].mxu0
      %v640 = vpop.f32.mrb[0].mxu0
      %v641 = vadd.f32 0.0, %v640
      %v642 = vpop.f32.mrb[0].mxu0
      %643 = vmatprep.mubr.bf16.mxu0 0
      %644 = vmatmul.mubr.bf16.gmra.mrb[0].mxu0 %v585
      %v645 = vpop.f32.mrb[0].mxu0
      %v646 = vadd.f32 0.0, %v645
      %v647 = vpop.f32.mrb[0].mxu0
      %v648 = vpop.f32.mrb[0].mxu0
      %v649 = vadd.f32 0.0, %v648
      %v650 = vpop.f32.mrb[0].mxu0
      %651 = vdwg.mxu0
      %v652 = vmul.f32 %v622, 0.11111111
      %v653 = vmul.f32 %v625, 0.11111111
      %v654 = vmul.f32 %v630, 0.11111111
      %v655 = vmul.f32 %v633, 0.11111111
      %v656 = vmul.f32 %v638, 0.11111111
      %v657 = vmul.f32 %v641, 0.11111111
      %v658 = vmul.f32 %v646, 0.11111111
      %v659 = vmul.f32 %v649, 0.11111111
      %660 = vst [vmem:[%s292] sm:$0xff] %v652
      %661 = vst [vmem:[%s292 + $0x8] sm:$0xff] %v653
      %662 = vst [vmem:[%s292 + $0x10] sm:$0xff] %v654
      %663 = vst [vmem:[%s292 + $0x18] sm:$0xff] %v655
      %664 = vst [vmem:[%s292 + $0x20] sm:$0xff] %v656
      %665 = vst [vmem:[%s292 + $0x28] sm:$0xff] %v657
      %666 = vst [vmem:[%s292 + $0x30] sm:$0xff] %v658
      %667 = vst [vmem:[%s292 + $0x38] sm:$0xff] %v659
      %s668 = smul.u32 8, %s20
      %p669 = scmp.lt.s32.totalorder %s19, 1
      %s670 = scalar_select %p669, %s19, 1
      %p671 = scmp.lt.s32.totalorder %s668, 7
      %s672 = scalar_select %p671, %s668, 7
      %s673 = smul.addr %s670, 8
      %s674 = sadd.s32 %s672, %s673
      %s675 = smul.addr %s674, 8
      %s676 = scalar_lea.vmem %s4, %s675
      // Predicated region
      $region37: #{block_forward.1} parent=35 // pred_check
        %p677 = pneg %p153
      $region38: #{block_forward.1} parent=35 // pred_check_branch
        %679 = sbr.rel (%p677) target = $region40
      $region39: #{block_forward.1} parent=35 // pred_region
        %s680 = smul.u32 8, %s20
      $region40: #{block_forward.1} parent=35 // pred_fallthru
        _
    $region36: #{block_forward.1} parent=5 // pred_fallthru
      _
    %p681 = scmp.le.s32.totalorder 2, %s10
    // Predicated region
    $region41: #{block_forward.1} parent=5 // pred_check
      %p682 = pneg %p681
    $region42: #{block_forward.1} parent=5 // pred_check_branch
      %684 = sbr.rel (%p682) target = $region44
    $region43: #{block_forward.1} parent=5 // pred_region
      %s685 = ssub.s32 %s10, 2
      // Predicated region
      $region45: #{block_forward.1} parent=43 // pred_check
        %p686 = pneg %p159
      $region46: #{block_forward.1} parent=43 // pred_check_branch
        %688 = sbr.rel (%p686) target = $region48
      $region47: #{block_forward.1} parent=43 // pred_region
        %s689 = smul.u32 8, %s22
        %p690 = scmp.lt.s32.totalorder %s21, 1
        %s691 = scalar_select %p690, %s21, 1
        %p692 = scmp.lt.s32.totalorder %s689, 7
        %s693 = scalar_select %p692, %s689, 7
        %s694 = smul.addr %s691, 8
        %s695 = sadd.s32 %s693, %s694
        %s696 = smul.addr %s695, 8
        %s697 = scalar_lea.vmem %s4, %s696
      $region48: #{block_forward.1} parent=43 // pred_fallthru
        _
    $region44: #{block_forward.1} parent=5 // pred_fallthru
      _
  $region6: #{block_forward.1} parent=0 // loop_footer
    %s14 = sadd.s32 1, %s10
  $region7: #{block_forward.1} parent=0 // loop_footer_branch
    %9 = sbr.rel target = $region3
  $region8: #{block_forward.1} parent=0 // loop_exit
    _

</llo_original>
